<compile_context>
chip_gen: v7x
topology: tpu7x:2x2x1
jax: 0.10.0
libtpu: 0.0.40
codegen_flags: <defaults>
</compile_context>

<pallas_src>
import jax
import jax.numpy as jnp
from jax.experimental import pallas as pl
from jax.experimental.pallas import tpu as pltpu


def _round_up(v, m):
    return ((v + m - 1) // m) * m


def _cdiv(a, b):
    return (a + b - 1) // b


#            vmem cap      tm     tk    to   mxu   force >=2 batch tiles
_GEN_TABLE = {
    "v5e": (100 << 20,     512,  1024,  512, 128,  False),
    "v6e": (100 << 20,    1024,  1024,  512, 256,  False),
    "v7x": ( 52 << 20,     512,   512,  256, 256,  True),
    "v5p": (100 << 20,     512,  1024,  512, 128,  True),
    "v4":  (100 << 20,     512,  1024,  512, 128,  True),
}
_GEN_DEFAULT = (None, 256, 512, 512, 128, False)   # unknown part: conservative


def _tpu_generation():
    kind = ""
    try:
        kind = (jax.devices()[0].device_kind or "").lower()
    except Exception:
        pass
    if "v7" in kind or "7x" in kind:
        return "v7x"
    if "v6" in kind:
        return "v6e"
    if "v5" in kind:
        return "v5e" if ("lite" in kind or "v5e" in kind) else "v5p"
    if "v4" in kind:
        return "v4"
    return "unknown"


def _physical_vmem_bytes():
    try:
        info = pltpu.get_tpu_info()
        for name in ("vmem_capacity_bytes", "vmem_bytes", "vmem_size_bytes"):
            v = getattr(info, name, None)
            if v:
                return int(v)
    except Exception:
        pass
    return None


def _vmem_estimate(tm, tk, to, ht, w_itm, out_itm):
    # Default pipelining double-buffers every BlockSpec-tiled operand/output;
    # sublane-1 bias blocks pad to 8 sublanes in VMEM.
    return (2 * tm * tk * w_itm          # x tiles
            + 2 * tk * ht * w_itm        # W_trunk tiles
            + 2 * 8 * ht * 4             # b_trunk
            + 2 * ht * to * w_itm        # Wh tiles
            + 2 * 8 * to * 4             # bh
            + 2 * tm * to * out_itm      # out tiles
            + tm * ht * 4                # f32 trunk accumulator (scratch)
            + tm * ht * w_itm)           # cached ReLU(comb) (scratch)


def prepare_params(params, class_output_size, regr_output_size, *,
                   matmul_dtype=jnp.bfloat16, out_dtype=jnp.bfloat16):
    """One-time weight prep: trunk fusion, MXU/lane padding, dtype casts, and
    per-generation tile selection under an explicit VMEM byte budget."""
    F, Hs = params["Ws"].shape
    Hl = params["Wl"].shape[1]
    Ht = Hs + Hl
    O = class_output_size + regr_output_size

    gen = _tpu_generation()
    cap, tm_t, tk_t, to_t, mxu_align, force2 = _GEN_TABLE.get(gen, _GEN_DEFAULT)
    phys = _physical_vmem_bytes()
    if phys is not None:
        cap = phys - (12 << 20) if cap is None else min(cap, phys - (12 << 20))
        cap = max(cap, 16 << 20)
    budget = (cap - (8 << 20)) if cap is not None else (12 << 20)
    budget = max(budget, 8 << 20)

    w_itm = jnp.dtype(matmul_dtype).itemsize
    out_itm = jnp.dtype(out_dtype).itemsize

    # trunk width padded to the MXU tile (128 on v5e, 256 on v6e/v7x)
    Ht_pad = _round_up(Ht, max(128, mxu_align))

    # K (feature) tiling: lane-aligned tiles of ~tk_t
    nkt = max(1, _cdiv(F, tk_t))
    tk = _round_up(_cdiv(F, nkt), 128)

    # head O tiling: keep Wh as a single block only when it is small, otherwise
    # stream it in lane-aligned O tiles (critical on v7x's 64 MiB VMEM)
    O_128 = _round_up(O, 128)
    if Ht_pad * O_128 * w_itm <= min(12 << 20, budget // 4):
        to = O_128
    else:
        n_ot = max(1, _cdiv(O, to_t))
        to = _round_up(_cdiv(O, n_ot), 128)

    # fit the VMEM budget at the largest batch tile: shrink tk, then tm, then to
    tm_max = tm_t
    while _vmem_estimate(tm_max, tk, to, Ht_pad, w_itm, out_itm) > budget and tk > 128:
        tk = max(128, _round_up(tk // 2, 128))
    while _vmem_estimate(tm_max, tk, to, Ht_pad, w_itm, out_itm) > budget and tm_max > 64:
        tm_max //= 2
    while _vmem_estimate(tm_max, tk, to, Ht_pad, w_itm, out_itm) > budget and to > 128:
        to = max(128, _round_up(to // 2, 128))

    F_pad = _round_up(F, tk)
    O_pad = _round_up(O, to)

    # fuse the two trunks: concat([x@Ws, x@Wl], 1) == x @ [Ws | Wl]
    w_trunk = jnp.concatenate([params["Ws"], params["Wl"]], axis=1)
    b_trunk = jnp.concatenate([params["bs"], params["bl"]], axis=1)
    wh, bh = params["Wh"], params["bh"]

    # zero padding (K rows, trunk cols + bias, head rows/cols) never changes the
    # result: ReLU(0 + 0) = 0 and the padded Wh rows / cols are zero.
    w_trunk = jnp.pad(w_trunk, ((0, F_pad - F), (0, Ht_pad - Ht)))
    b_trunk = jnp.pad(b_trunk, ((0, 0), (0, Ht_pad - Ht)))
    wh = jnp.pad(wh, ((0, Ht_pad - Ht), (0, O_pad - O)))
    bh = jnp.pad(bh, ((0, 0), (0, O_pad - O)))

    return {
        "w_trunk": w_trunk.astype(matmul_dtype),
        "b_trunk": b_trunk.astype(jnp.float32),
        "wh": wh.astype(matmul_dtype),
        "bh": bh.astype(jnp.float32),
        "F": F, "F_pad": F_pad, "tk": tk,
        "Ht_pad": Ht_pad, "O": O, "O_pad": O_pad, "to": to,
        "tm_max": tm_max, "mxu_align": mxu_align, "force2": force2,
        "vmem_limit": int(cap) if cap is not None else None,
        "matmul_dtype": matmul_dtype, "out_dtype": out_dtype,
    }


def sparse_ffn_forward(x, prep, class_output_size, regr_output_size):
    """Fused trunks+head forward: batch-tiled x (K-tiles then O-tiles) grid."""
    B, F = x.shape
    assert F == prep["F"], "feature dim mismatch with prepared params"
    Ht_pad, O, O_pad, to = prep["Ht_pad"], prep["O"], prep["O_pad"], prep["to"]
    F_pad, tk = prep["F_pad"], prep["tk"]
    md, od = prep["matmul_dtype"], prep["out_dtype"]
    mxu_align = prep["mxu_align"]

    # batch tile: large enough to clear the HBM roofline for the per-tile
    # W_trunk re-stream, MXU-aligned when the batch allows it.
    if B >= mxu_align:
        tm = min(prep["tm_max"], _round_up(B, mxu_align))
    else:
        tm = min(prep["tm_max"], max(16, _round_up(B, 16)))
    # on multi-TensorCore parts make sure the "parallel" axis has >= 2 tiles
    if prep["force2"] and B >= 32:
        while _cdiv(B, tm) < 2 and tm > 16:
            tm = max(16, tm // 2)
    B_pad = _round_up(B, tm)

    x_p = x.astype(md)
    if B_pad != B or F_pad != F:
        x_p = jnp.pad(x_p, ((0, B_pad - B), (0, F_pad - F)))

    nkt = F_pad // tk       # trunk (K-reduction) steps
    n_ot = O_pad // to      # head (output-tile) steps
    grid = (B_pad // tm, nkt + n_ot)
    last_k = nkt - 1

    def kernel(x_ref, wt_ref, bt_ref, wh_ref, bh_ref, out_ref, acc_ref, comb_ref):
        s = pl.program_id(1)

        @pl.when(s < nkt)
        def _trunk():
            part = jnp.dot(x_ref[...], wt_ref[...],
                           preferred_element_type=jnp.float32)

            @pl.when(s == 0)
            def _():                      # bias folded into the first accumulate
                acc_ref[...] = part + bt_ref[...]

            @pl.when(s > 0)
            def _():
                acc_ref[...] += part

        @pl.when(s >= nkt)
        def _head():
            @pl.when(s == nkt)
            def _():                      # ReLU + cast once, reused per O tile
                comb_ref[...] = jnp.maximum(acc_ref[...], 0.0).astype(comb_ref.dtype)

            out = jnp.dot(comb_ref[...], wh_ref[...],
                          preferred_element_type=jnp.float32)
            out_ref[...] = (out + bh_ref[...]).astype(out_ref.dtype)

    out = pl.pallas_call(
        kernel,
        out_shape=jax.ShapeDtypeStruct((B_pad, O_pad), od),
        grid=grid,
        in_specs=[
            # indices are clamped so no operand is re-fetched during the other phase
            pl.BlockSpec((tm, tk), lambda i, s: (i, jnp.minimum(s, last_k))),       # x
            pl.BlockSpec((tk, Ht_pad), lambda i, s: (jnp.minimum(s, last_k), 0)),   # W_trunk
            pl.BlockSpec((1, Ht_pad), lambda i, s: (0, 0)),                         # b_trunk
            pl.BlockSpec((Ht_pad, to), lambda i, s: (0, jnp.maximum(s - nkt, 0))),  # Wh tile
            pl.BlockSpec((1, to), lambda i, s: (0, jnp.maximum(s - nkt, 0))),       # bh tile
        ],
        out_specs=pl.BlockSpec((tm, to), lambda i, s: (i, jnp.maximum(s - nkt, 0))),
        scratch_shapes=[
            pltpu.VMEM((tm, Ht_pad), jnp.float32),   # f32 trunk accumulator
            pltpu.VMEM((tm, Ht_pad), md),            # cached ReLU(comb)
        ],
        compiler_params=pltpu.CompilerParams(
            dimension_semantics=("parallel", "arbitrary"),
            vmem_limit_bytes=prep["vmem_limit"],
        ),
    )(x_p, prep["w_trunk"], prep["b_trunk"], prep["wh"], prep["bh"])

    # drop batch / lane padding, return f32 (module semantics), split the heads
    out = out[:B, :O].astype(jnp.float32)
    return out[:, :class_output_size], out[:, class_output_size:]


def init_params(key, in_features, hidden_shared, hidden_local, out_total):
    ks = jax.random.split(key, 6)

    def lin(kw, fan_in, fan_out):
        return (jax.random.normal(kw, (fan_in, fan_out), jnp.float32)
                * (1.0 / jnp.sqrt(fan_in)))

    return {
        "Ws": lin(ks[0], in_features, hidden_shared),
        "bs": jax.random.normal(ks[1], (1, hidden_shared), jnp.float32) * 0.01,
        "Wl": lin(ks[2], in_features, hidden_local),
        "bl": jax.random.normal(ks[3], (1, hidden_local), jnp.float32) * 0.01,
        "Wh": lin(ks[4], hidden_shared + hidden_local, out_total),
        "bh": jax.random.normal(ks[5], (1, out_total), jnp.float32) * 0.01,
    }


def reference_forward(x, params, class_output_size, matmul_dtype=jnp.bfloat16):
    # Same math as the PyTorch module; matmuls use the same bf16 operands /
    # f32 accumulation as the kernel so the comparison is tight.
    md = matmul_dtype
    shared = jnp.maximum(
        jnp.dot(x.astype(md), params["Ws"].astype(md),
                preferred_element_type=jnp.float32) + params["bs"], 0.0)
    local = jnp.maximum(
        jnp.dot(x.astype(md), params["Wl"].astype(md),
                preferred_element_type=jnp.float32) + params["bl"], 0.0)
    combined = jnp.concatenate([shared, local], axis=1)
    out = jnp.dot(combined.astype(md), params["Wh"].astype(md),
                  preferred_element_type=jnp.float32) + params["bh"]
    return out[:, :class_output_size], out[:, class_output_size:]


if __name__ == "__main__":
    key = jax.random.PRNGKey(0)
    kx, kp = jax.random.split(key)

    batch = 8
    in_features = 32
    hidden_shared = 64
    hidden_local = 64
    class_output_size = 16
    regr_output_size = 16

    x = jax.random.normal(kx, (batch, in_features), jnp.float32)
    params = init_params(kp, in_features, hidden_shared, hidden_local,
                         class_output_size + regr_output_size)

    prep = prepare_params(params, class_output_size, regr_output_size)
    cls_out, regr_out = sparse_ffn_forward(
        x, prep, class_output_size, regr_output_size)
    jax.block_until_ready(cls_out)
    jax.block_until_ready(regr_out)

    cls_ref, regr_ref = reference_forward(x, params, class_output_size)
    assert cls_out.shape == (batch, class_output_size)
    assert regr_out.shape == (batch, regr_output_size)
    assert jnp.allclose(cls_out, cls_ref, atol=2e-2, rtol=2e-2)
    assert jnp.allclose(regr_out, regr_ref, atol=2e-2, rtol=2e-2)

    print("KERNEL_OK")
</pallas_src>

<mosaic_0001>
module attributes {stable_mosaic.version = 11 : i64} {
  func.func @kernel(%arg0: i32, %arg1: i32, %arg2: memref<16x128xbf16, #tpu.memory_space<vmem>>, %arg3: memref<128x128xbf16, #tpu.memory_space<vmem>>, %arg4: memref<1x128xf32, #tpu.memory_space<vmem>>, %arg5: memref<128x128xbf16, #tpu.memory_space<vmem>>, %arg6: memref<1x128xf32, #tpu.memory_space<vmem>>, %arg7: memref<16x128xbf16, #tpu.memory_space<vmem>>, %arg8: memref<16x128xf32, #tpu.memory_space<vmem>>, %arg9: memref<16x128xbf16, #tpu.memory_space<vmem>>) attributes {dimension_semantics = [#tpu.dimension_semantics<parallel>, #tpu.dimension_semantics<arbitrary>], iteration_bounds = array<i64: 1, 2>, scalar_prefetch = 0 : i64, scratch_operands = 2 : i64, tpu.core_type = #tpu.core_type<tc>, window_params = [{transform_indices = @transform_0, window_bounds = array<i64: 16, 128>}, {transform_indices = @transform_1, window_bounds = array<i64: 128, 128>}, {pipeline_mode = #tpu.pipeline_mode<synchronous>, transform_indices = @transform_2, window_bounds = array<i64: 1, 128>}, {transform_indices = @transform_3, window_bounds = array<i64: 128, 128>}, {transform_indices = @transform_4, window_bounds = array<i64: 1, 128>}, {transform_indices = @transform_5, window_bounds = array<i64: 16, 128>}]} {
    %c1_i32 = arith.constant 1 : i32
    %0 = arith.cmpi slt, %arg1, %c1_i32 : i32
    %1 = arith.extui %0 : i1 to i32
    %c0_i32 = arith.constant 0 : i32
    %2 = arith.cmpi ne, %1, %c0_i32 : i32
    scf.if %2 {
      %c0 = arith.constant 0 : index
      %c0_2 = arith.constant 0 : index
      %6 = vector.load %arg2[%c0, %c0_2] : memref<16x128xbf16, #tpu.memory_space<vmem>>, vector<16x128xbf16>
      %c0_3 = arith.constant 0 : index
      %c0_4 = arith.constant 0 : index
      %7 = vector.load %arg3[%c0_3, %c0_4] : memref<128x128xbf16, #tpu.memory_space<vmem>>, vector<128x128xbf16>
      %cst = arith.constant dense<0.000000e+00> : vector<16x128xf32>
      %8 = tpu.matmul %6, %7, %cst {dimension_numbers = #tpu.dot_dimension_numbers<[1], [0], [0], [1], [0, 0, 1, 1], [], []>} : vector<16x128xbf16>, vector<128x128xbf16>, vector<16x128xf32> -> vector<16x128xf32>
      %c0_i32_5 = arith.constant 0 : i32
      %9 = arith.cmpi eq, %arg1, %c0_i32_5 : i32
      %10 = arith.extui %9 : i1 to i32
      %c0_i32_6 = arith.constant 0 : i32
      %11 = arith.cmpi ne, %10, %c0_i32_6 : i32
      scf.if %11 {
        %c0_9 = arith.constant 0 : index
        %c0_10 = arith.constant 0 : index
        %15 = vector.load %arg4[%c0_9, %c0_10] : memref<1x128xf32, #tpu.memory_space<vmem>>, vector<1x128xf32>
        %16 = vector.broadcast %15 : vector<1x128xf32> to vector<16x128xf32>
        %17 = arith.addf %8, %16 : vector<16x128xf32>
        %c0_11 = arith.constant 0 : index
        %c0_12 = arith.constant 0 : index
        %18 = vector.load %arg8[%c0_11, %c0_12] : memref<16x128xf32, #tpu.memory_space<vmem>>, vector<16x128xf32>
        tpu.vector_store %arg8[%c0_11, %c0_12], %17 {strides = array<i32>} : memref<16x128xf32, #tpu.memory_space<vmem>>, vector<16x128xf32>,
      } else {
      }
      %c0_i32_7 = arith.constant 0 : i32
      %12 = arith.cmpi sgt, %arg1, %c0_i32_7 : i32
      %13 = arith.extui %12 : i1 to i32
      %c0_i32_8 = arith.constant 0 : i32
      %14 = arith.cmpi ne, %13, %c0_i32_8 : i32
      scf.if %14 {
        %c0_9 = arith.constant 0 : index
        %c0_10 = arith.constant 0 : index
        %15 = vector.load %arg8[%c0_9, %c0_10] : memref<16x128xf32, #tpu.memory_space<vmem>>, vector<16x128xf32>
        %16 = arith.addf %15, %8 : vector<16x128xf32>
        %c0_11 = arith.constant 0 : index
        %c0_12 = arith.constant 0 : index
        %17 = vector.load %arg8[%c0_11, %c0_12] : memref<16x128xf32, #tpu.memory_space<vmem>>, vector<16x128xf32>
        tpu.vector_store %arg8[%c0_11, %c0_12], %16 {strides = array<i32>} : memref<16x128xf32, #tpu.memory_space<vmem>>, vector<16x128xf32>,
      } else {
      }
    } else {
    }
    %c1_i32_0 = arith.constant 1 : i32
    %3 = arith.cmpi sge, %arg1, %c1_i32_0 : i32
    %4 = arith.extui %3 : i1 to i32
    %c0_i32_1 = arith.constant 0 : i32
    %5 = arith.cmpi ne, %4, %c0_i32_1 : i32
    scf.if %5 {
      %c1_i32_2 = arith.constant 1 : i32
      %6 = arith.cmpi eq, %arg1, %c1_i32_2 : i32
      %7 = arith.extui %6 : i1 to i32
      %c0_i32_3 = arith.constant 0 : i32
      %8 = arith.cmpi ne, %7, %c0_i32_3 : i32
      scf.if %8 {
        %c0_11 = arith.constant 0 : index
        %c0_12 = arith.constant 0 : index
        %17 = vector.load %arg8[%c0_11, %c0_12] : memref<16x128xf32, #tpu.memory_space<vmem>>, vector<16x128xf32>
        %cst_13 = arith.constant 0.000000e+00 : f32
        %18 = vector.broadcast %cst_13 : f32 to vector<16x128xf32>
        %19 = arith.maximumf %17, %18 : vector<16x128xf32>
        %20 = arith.truncf %19 : vector<16x128xf32> to vector<16x128xbf16>
        %c0_14 = arith.constant 0 : index
        %c0_15 = arith.constant 0 : index
        %21 = vector.load %arg9[%c0_14, %c0_15] : memref<16x128xbf16, #tpu.memory_space<vmem>>, vector<16x128xbf16>
        tpu.vector_store %arg9[%c0_14, %c0_15], %20 {strides = array<i32>} : memref<16x128xbf16, #tpu.memory_space<vmem>>, vector<16x128xbf16>,
      } else {
      }
      %c0 = arith.constant 0 : index
      %c0_4 = arith.constant 0 : index
      %9 = vector.load %arg9[%c0, %c0_4] : memref<16x128xbf16, #tpu.memory_space<vmem>>, vector<16x128xbf16>
      %c0_5 = arith.constant 0 : index
      %c0_6 = arith.constant 0 : index
      %10 = vector.load %arg5[%c0_5, %c0_6] : memref<128x128xbf16, #tpu.memory_space<vmem>>, vector<128x128xbf16>
      %cst = arith.constant dense<0.000000e+00> : vector<16x128xf32>
      %11 = tpu.matmul %9, %10, %cst {dimension_numbers = #tpu.dot_dimension_numbers<[1], [0], [0], [1], [0, 0, 1, 1], [], []>} : vector<16x128xbf16>, vector<128x128xbf16>, vector<16x128xf32> -> vector<16x128xf32>
      %c0_7 = arith.constant 0 : index
      %c0_8 = arith.constant 0 : index
      %12 = vector.load %arg6[%c0_7, %c0_8] : memref<1x128xf32, #tpu.memory_space<vmem>>, vector<1x128xf32>
      %13 = vector.broadcast %12 : vector<1x128xf32> to vector<16x128xf32>
      %14 = arith.addf %11, %13 : vector<16x128xf32>
      %15 = arith.truncf %14 : vector<16x128xf32> to vector<16x128xbf16>
      %c0_9 = arith.constant 0 : index
      %c0_10 = arith.constant 0 : index
      %16 = vector.load %arg7[%c0_9, %c0_10] : memref<16x128xbf16, #tpu.memory_space<vmem>>, vector<16x128xbf16>
      tpu.vector_store %arg7[%c0_9, %c0_10], %15 {strides = array<i32>} : memref<16x128xbf16, #tpu.memory_space<vmem>>, vector<16x128xbf16>,
    } else {
    }
    return
  }
  func.func @transform_0(%arg0: i32, %arg1: i32) -> (i32, i32) {
    %c0_i32 = arith.constant 0 : i32
    %0 = arith.minsi %arg1, %c0_i32 : i32
    %c0_i32_0 = arith.constant 0 : i32
    return %arg0, %0 : i32, i32
  }
  func.func @transform_1(%arg0: i32, %arg1: i32) -> (i32, i32) {
    %c0_i32 = arith.constant 0 : i32
    %0 = arith.minsi %arg1, %c0_i32 : i32
    %c0_i32_0 = arith.constant 0 : i32
    %c0_i32_1 = arith.constant 0 : i32
    return %0, %c0_i32_0 : i32, i32
  }
  func.func @transform_2(%arg0: i32, %arg1: i32) -> (i32, i32) {
    %c0_i32 = arith.constant 0 : i32
    %c0_i32_0 = arith.constant 0 : i32
    %c0_i32_1 = arith.constant 0 : i32
    return %c0_i32, %c0_i32_0 : i32, i32
  }
  func.func @transform_3(%arg0: i32, %arg1: i32) -> (i32, i32) {
    %c1_i32 = arith.constant 1 : i32
    %0 = arith.subi %arg1, %c1_i32 : i32
    %c0_i32 = arith.constant 0 : i32
    %1 = arith.maxsi %0, %c0_i32 : i32
    %c0_i32_0 = arith.constant 0 : i32
    %c0_i32_1 = arith.constant 0 : i32
    return %c0_i32_0, %1 : i32, i32
  }
  func.func @transform_4(%arg0: i32, %arg1: i32) -> (i32, i32) {
    %c1_i32 = arith.constant 1 : i32
    %0 = arith.subi %arg1, %c1_i32 : i32
    %c0_i32 = arith.constant 0 : i32
    %1 = arith.maxsi %0, %c0_i32 : i32
    %c0_i32_0 = arith.constant 0 : i32
    %c0_i32_1 = arith.constant 0 : i32
    return %c0_i32_0, %1 : i32, i32
  }
  func.func @transform_5(%arg0: i32, %arg1: i32) -> (i32, i32) {
    %c1_i32 = arith.constant 1 : i32
    %0 = arith.subi %arg1, %c1_i32 : i32
    %c0_i32 = arith.constant 0 : i32
    %1 = arith.maxsi %0, %c0_i32 : i32
    %c0_i32_0 = arith.constant 0 : i32
    return %arg0, %1 : i32, i32
  }
}

</mosaic_0001>

<llo_original>
// kernel: tpu_custom_call.1
$region0: #{tpu_custom_call.1}
  #allocation0 [shape = 'u32[]', space=smem, size = 0x4, offset = 0x4, fixed_abs, tag = 'smem constant byte address 0x4 - core index']
  #allocation1 [shape = 'u32[144,128]{1,0:T(1,128)}', space=vmem, size = 0x12000, scoped, tag = 'internal scratch']
  #allocation2 [shape = 'f32[16,128]{1,0:T(8,128)}', space=vmem, size = 0x2000, scoped, tag = 'scratch operand']
  #allocation3 [shape = 'bf16[16,128]{1,0:T(16,128)(2,1)}', space=vmem, size = 0x1000, scoped, tag = 'scratch operand']
  %s0 = inlined_call_operand.hbm [shape: bf16[16,128], index: 0, kind: input, shape index: {}]
  %s1 = inlined_call_operand.hbm [shape: bf16[128,128], index: 1, kind: input, shape index: {}]
  %s2 = inlined_call_operand.vmem [shape: f32[1,128], index: 2, kind: input, shape index: {}]
  %s3 = inlined_call_operand.hbm [shape: bf16[128,128], index: 3, kind: input, shape index: {}]
  %s4 = inlined_call_operand.vmem [shape: f32[1,128], index: 4, kind: input, shape index: {}]
  %s5 = inlined_call_operand.hbm [shape: bf16[16,128], index: 5, kind: output, shape index: {}]
  %s6 = sld [smem:[#allocation0]]
  $region85: #{tpu_custom_call.1} parent=0
    _
  %s8 = ssub.s32 1, %s6
  %s9 = scalar_select 0, %s8, %s6
  $region1: #{tpu_custom_call.1} parent=0
    #allocation4 [shape = 'u8[8192]{0}', space=vmem, size = 0x2000, scoped, tag = 'input window, operand 0']
    #allocation5 [shape = 's32[2]{0}', space=sflag, size = 0x8, scoped, tag = 'scoped memory for tpu_custom_call.1']
    #allocation6 [shape = 's32[2]{0}', space=sflag, size = 0x8, scoped, tag = 'scoped memory for tpu_custom_call.1']
    #allocation7 [shape = 'u8[65536]{0}', space=vmem, size = 0x10000, scoped, tag = 'input window, operand 1']
    #allocation8 [shape = 's32[2]{0}', space=sflag, size = 0x8, scoped, tag = 'scoped memory for tpu_custom_call.1']
    #allocation9 [shape = 'u8[65536]{0}', space=vmem, size = 0x10000, scoped, tag = 'input window, operand 3']
    #allocation10 [shape = 'u8[8192]{0}', space=vmem, size = 0x2000, scoped, tag = 'output window, operand 0']
    %10 = vsyncpa [#allocation5], 0
    %s11 = scalar_lea.sflag [#allocation5], 1
    %12 = vsyncpa %s11, 0
    %13 = vsyncpa [#allocation8], 0
    %s14 = scalar_lea.sflag [#allocation8], 1
    %15 = vsyncpa %s14, 0
    %16 = vsyncpa [#allocation6], 0
    %s17 = scalar_lea.sflag [#allocation6], 1
    %18 = vsyncpa %s17, 0
    loop: start=0, step=1, limit=4
    $region2: #{tpu_custom_call.1} parent=1 // loop_pre_header
      _
    $region3: #{tpu_custom_call.1} parent=1 // loop_header
      %s20 = sphi 0, %s24
      %p21 = scmp.ge.s32.totalorder %s20, 4
      %s27 = sphi 0, %s39
      %s28 = sphi 0, %s35
      %s29 = sphi 0, %s27
      %s30 = sphi 0, %s28
      %s31 = sphi 0, %s29
      %s32 = sphi 0, %s30
      %s48 = sphi 0, %s50
      %s51 = sphi 0, %s48
      %s52 = sphi 0, %s51
      %s68 = sphi 0, %s52
      %s78 = sphi 0, %s80
      %s81 = sphi 0, %s78
      %s82 = sphi 0, %s81
      %s98 = sphi 0, %s82
      %s102 = sphi 0, %s102
      %s104 = sphi 0, %s102
      %s105 = sphi 0, %s104
      %s119 = sphi 0, %s105
      %s131 = sphi 0, %s133
      %s134 = sphi 0, %s131
      %s135 = sphi 0, %s134
      %s151 = sphi 0, %s135
      %s163 = sphi 0, %s165
      %s166 = sphi 0, %s163
      %s167 = sphi 0, %s166
      %s183 = sphi 0, %s167
      %s197 = sphi 0, %s199
      %s200 = sphi 0, %s197
      %s201 = sphi 0, %s200
      %s217 = sphi 0, %s201
    $region4: #{tpu_custom_call.1} parent=1 // loop_header_branch
      %23 = sbr.rel (%p21) target = $region8
    $region5: #{tpu_custom_call.1} parent=1 // loop_body
      %s25 = ssub.s32 %s20, 1
      %s26 = ssub.s32 %s20, 2
      %s33 = sadd.s32 1, %s28
      %p34 = scmp.ge.s32.totalorder %s33, 2
      %s35 = scalar_select %p34, 0, %s33
      %s36 = sadd.s32 1, %s27
      %s37 = scalar_select %p34, %s36, %s27
      %p38 = scmp.ge.s32.totalorder %s37, 1
      %s39 = scalar_select %p38, 0, %s37
      %p40 = scmp.lt.s32.totalorder %s28, 0
      %s41 = scalar_select %p40, %s28, 0
      %p42 = scmp.lt.s32.totalorder %s35, 0
      %s43 = scalar_select %p42, %s35, 0
      %s44 = ssub.s32 %s27, %s39
      %s45 = ssub.s32 %s41, %s43
      %s46 = sor.u32 %s44, %s45
      %p47 = scmp.eq.s32.totalorder %s46, 0
      %s49 = sadd.s32 %s48, 1
      %s50 = scalar_select %p47, %s48, %s49
      %p53 = pneg %p47
      %p54 = scmp.eq.s32.totalorder %s20, 1
      %p55 = por %p53, %p54
      %p56 = scmp.ne.s32.totalorder %s48, %s51
      %p57 = scmp.eq.s32.totalorder %s20, 0
      %p58 = por %p56, %p57
      %p59 = scmp.ne.s32.totalorder %s48, %s51
      %p60 = scmp.eq.s32.totalorder %s25, 1
      %p61 = por %p59, %p60
      %p62 = scmp.ne.s32.totalorder %s51, %s52
      %p63 = scmp.eq.s32.totalorder %s25, 0
      %p64 = por %p62, %p63
      %p65 = scmp.ne.s32.totalorder %s51, %s52
      %p66 = scmp.eq.s32.totalorder %s26, 1
      %p67 = por %p65, %p66
      %p69 = scmp.ne.s32.totalorder %s52, %s68
      %p70 = scmp.eq.s32.totalorder %s26, 0
      %p71 = por %p69, %p70
      %p72 = scmp.lt.s32.totalorder %s28, 0
      %s73 = scalar_select %p72, %s28, 0
      %p74 = scmp.lt.s32.totalorder %s35, 0
      %s75 = scalar_select %p74, %s35, 0
      %s76 = ssub.s32 %s73, %s75
      %p77 = scmp.eq.s32.totalorder %s76, 0
      %s79 = sadd.s32 %s78, 1
      %s80 = scalar_select %p77, %s78, %s79
      %p83 = pneg %p77
      %p84 = scmp.eq.s32.totalorder %s20, 1
      %p85 = por %p83, %p84
      %p86 = scmp.ne.s32.totalorder %s78, %s81
      %p87 = scmp.eq.s32.totalorder %s20, 0
      %p88 = por %p86, %p87
      %p89 = scmp.ne.s32.totalorder %s78, %s81
      %p90 = scmp.eq.s32.totalorder %s25, 1
      %p91 = por %p89, %p90
      %p92 = scmp.ne.s32.totalorder %s81, %s82
      %p93 = scmp.eq.s32.totalorder %s25, 0
      %p94 = por %p92, %p93
      %p95 = scmp.ne.s32.totalorder %s81, %s82
      %p96 = scmp.eq.s32.totalorder %s26, 1
      %p97 = por %p95, %p96
      %p99 = scmp.ne.s32.totalorder %s82, %s98
      %p100 = scmp.eq.s32.totalorder %s26, 0
      %p101 = por %p99, %p100
      %s103 = sadd.s32 %s102, 1
      %p106 = scmp.eq.s32.totalorder %s20, 1
      %p107 = scmp.ne.s32.totalorder %s102, %s104
      %p108 = scmp.eq.s32.totalorder %s20, 0
      %p109 = por %p107, %p108
      %p110 = scmp.ne.s32.totalorder %s102, %s104
      %p111 = scmp.eq.s32.totalorder %s25, 1
      %p112 = por %p110, %p111
      %p113 = scmp.ne.s32.totalorder %s104, %s105
      %p114 = scmp.eq.s32.totalorder %s25, 0
      %p115 = por %p113, %p114
      %p116 = scmp.ne.s32.totalorder %s104, %s105
      %p117 = scmp.eq.s32.totalorder %s26, 1
      %p118 = por %p116, %p117
      %p120 = scmp.ne.s32.totalorder %s105, %s119
      %p121 = scmp.eq.s32.totalorder %s26, 0
      %p122 = por %p120, %p121
      %s123 = ssub.s32 %s28, 1
      %p124 = scmp.gt.s32.totalorder %s123, 0
      %s125 = scalar_select %p124, %s123, 0
      %s126 = ssub.s32 %s35, 1
      %p127 = scmp.gt.s32.totalorder %s126, 0
      %s128 = scalar_select %p127, %s126, 0
      %s129 = ssub.s32 %s125, %s128
      %p130 = scmp.eq.s32.totalorder %s129, 0
      %s132 = sadd.s32 %s131, 1
      %s133 = scalar_select %p130, %s131, %s132
      %p136 = pneg %p130
      %p137 = scmp.eq.s32.totalorder %s20, 1
      %p138 = por %p136, %p137
      %p139 = scmp.ne.s32.totalorder %s131, %s134
      %p140 = scmp.eq.s32.totalorder %s20, 0
      %p141 = por %p139, %p140
      %p142 = scmp.ne.s32.totalorder %s131, %s134
      %p143 = scmp.eq.s32.totalorder %s25, 1
      %p144 = por %p142, %p143
      %p145 = scmp.ne.s32.totalorder %s134, %s135
      %p146 = scmp.eq.s32.totalorder %s25, 0
      %p147 = por %p145, %p146
      %p148 = scmp.ne.s32.totalorder %s134, %s135
      %p149 = scmp.eq.s32.totalorder %s26, 1
      %p150 = por %p148, %p149
      %p152 = scmp.ne.s32.totalorder %s135, %s151
      %p153 = scmp.eq.s32.totalorder %s26, 0
      %p154 = por %p152, %p153
      %s155 = ssub.s32 %s28, 1
      %p156 = scmp.gt.s32.totalorder %s155, 0
      %s157 = scalar_select %p156, %s155, 0
      %s158 = ssub.s32 %s35, 1
      %p159 = scmp.gt.s32.totalorder %s158, 0
      %s160 = scalar_select %p159, %s158, 0
      %s161 = ssub.s32 %s157, %s160
      %p162 = scmp.eq.s32.totalorder %s161, 0
      %s164 = sadd.s32 %s163, 1
      %s165 = scalar_select %p162, %s163, %s164
      %p168 = pneg %p162
      %p169 = scmp.eq.s32.totalorder %s20, 1
      %p170 = por %p168, %p169
      %p171 = scmp.ne.s32.totalorder %s163, %s166
      %p172 = scmp.eq.s32.totalorder %s20, 0
      %p173 = por %p171, %p172
      %p174 = scmp.ne.s32.totalorder %s163, %s166
      %p175 = scmp.eq.s32.totalorder %s25, 1
      %p176 = por %p174, %p175
      %p177 = scmp.ne.s32.totalorder %s166, %s167
      %p178 = scmp.eq.s32.totalorder %s25, 0
      %p179 = por %p177, %p178
      %p180 = scmp.ne.s32.totalorder %s166, %s167
      %p181 = scmp.eq.s32.totalorder %s26, 1
      %p182 = por %p180, %p181
      %p184 = scmp.ne.s32.totalorder %s167, %s183
      %p185 = scmp.eq.s32.totalorder %s26, 0
      %p186 = por %p184, %p185
      %s187 = ssub.s32 %s28, 1
      %p188 = scmp.gt.s32.totalorder %s187, 0
      %s189 = scalar_select %p188, %s187, 0
      %s190 = ssub.s32 %s35, 1
      %p191 = scmp.gt.s32.totalorder %s190, 0
      %s192 = scalar_select %p191, %s190, 0
      %s193 = ssub.s32 %s27, %s39
      %s194 = ssub.s32 %s189, %s192
      %s195 = sor.u32 %s193, %s194
      %p196 = scmp.eq.s32.totalorder %s195, 0
      %s198 = sadd.s32 %s197, 1
      %s199 = scalar_select %p196, %s197, %s198
      %p202 = pneg %p196
      %p203 = scmp.eq.s32.totalorder %s20, 1
      %p204 = por %p202, %p203
      %p205 = scmp.ne.s32.totalorder %s197, %s200
      %p206 = scmp.eq.s32.totalorder %s20, 0
      %p207 = por %p205, %p206
      %p208 = scmp.ne.s32.totalorder %s197, %s200
      %p209 = scmp.eq.s32.totalorder %s25, 1
      %p210 = por %p208, %p209
      %p211 = scmp.ne.s32.totalorder %s200, %s201
      %p212 = scmp.eq.s32.totalorder %s25, 0
      %p213 = por %p211, %p212
      %p214 = scmp.ne.s32.totalorder %s200, %s201
      %p215 = scmp.eq.s32.totalorder %s26, 1
      %p216 = por %p214, %p215
      %p218 = scmp.ne.s32.totalorder %s201, %s217
      %p219 = scmp.eq.s32.totalorder %s26, 0
      %p220 = por %p218, %p219
      %p221 = scmp.le.s32.totalorder 1, %s20
      %p222 = scmp.lt.s32.totalorder %s20, 3
      %p223 = pnand %p221, %p222
      %p224 = pneg %p223
      // Predicated region
      $region9: #{tpu_custom_call.1} parent=5 // pred_check
        _
      $region10: #{tpu_custom_call.1} parent=5 // pred_check_branch
        %226 = sbr.rel (%p223) target = $region12
      $region11: #{tpu_custom_call.1} parent=5 // pred_region
        %s227 = ssub.s32 %s20, 1
        // Predicated region
        $region13: #{tpu_custom_call.1} parent=11 // pred_check
          %p228 = pneg %p115
        $region14: #{tpu_custom_call.1} parent=11 // pred_check_branch
          %230 = sbr.rel (%p228) target = $region16
        $region15: #{tpu_custom_call.1} parent=11 // pred_region
          _
        $region16: #{tpu_custom_call.1} parent=11 // pred_fallthru
          _
      $region12: #{tpu_custom_call.1} parent=5 // pred_fallthru
        _
      %p231 = scmp.lt.s32.totalorder %s20, 2
      // Predicated region
      $region17: #{tpu_custom_call.1} parent=5 // pred_check
        %p232 = pneg %p231
      $region18: #{tpu_custom_call.1} parent=5 // pred_check_branch
        %234 = sbr.rel (%p232) target = $region20
      $region19: #{tpu_custom_call.1} parent=5 // pred_region
        // Predicated region
        $region21: #{tpu_custom_call.1} parent=19 // pred_check
          %p235 = pneg %p58
        $region22: #{tpu_custom_call.1} parent=19 // pred_check_branch
          %237 = sbr.rel (%p235) target = $region24
        $region23: #{tpu_custom_call.1} parent=19 // pred_region
          %s238 = sand.u32 %s48, 1
          %s239 = scalar_lea.sflag [#allocation5], %s238
          %s240 = sand.u32 %s48, 1
          %s241 = smul.addr %s240, 8
          %s242 = scalar_lea.vmem [#allocation4], %s241
          %p243 = scmp.lt.s32.totalorder %s28, 0
          %s244 = scalar_select %p243, %s28, 0
          %s245 = smul.u32 2, %s27
          %s247 = ssub.s32 128, 128
          %248 = vsyncadd %s239, %s247
          %s249 = sadd.s32 %s244, %s245
          %s250 = smul.addr %s249, 64
          %s251 = scalar_lea.hbm %s0, %s250
          %s252 = sshll.u32 %s242, 4
          %s253 = int_to_ptr.vmem [resolvable:$true] %s252
          %258 = dma.hbm_to_vmem [thread:$0]  %s251, 128, %s253, %s239, 64, 64, 4
        $region24: #{tpu_custom_call.1} parent=19 // pred_fallthru
          _
        // Predicated region
        $region25: #{tpu_custom_call.1} parent=19 // pred_check
          %p259 = pneg %p88
        $region26: #{tpu_custom_call.1} parent=19 // pred_check_branch
          %261 = sbr.rel (%p259) target = $region28
        $region27: #{tpu_custom_call.1} parent=19 // pred_region
          %s262 = sand.u32 %s20, 1
          %s263 = scalar_lea.sflag [#allocation8], %s262
          %s264 = sand.u32 %s78, 1
          %s265 = smul.addr %s264, 64
          %s266 = scalar_lea.vmem [#allocation7], %s265
          %p267 = scmp.lt.s32.totalorder %s28, 0
          %s268 = scalar_select %p267, %s28, 0
          %s269 = smul.u32 16, %s268
          %s271 = ssub.s32 1024, 1024
          %272 = vsyncadd %s263, %s271
          %s273 = smul.addr %s269, 64
          %s274 = scalar_lea.hbm %s1, %s273
          %s275 = sshll.u32 %s266, 4
          %s276 = int_to_ptr.vmem [resolvable:$true] %s275
          %281 = dma.hbm_to_vmem [thread:$0]  %s274, 1024, %s276, %s263, 64, 64, 4
        $region28: #{tpu_custom_call.1} parent=19 // pred_fallthru
          _
        // Predicated region
        $region29: #{tpu_custom_call.1} parent=19 // pred_check
          %p282 = pneg %p141
        $region30: #{tpu_custom_call.1} parent=19 // pred_check_branch
          %284 = sbr.rel (%p282) target = $region32
        $region31: #{tpu_custom_call.1} parent=19 // pred_region
          %s285 = sand.u32 %s20, 1
          %s286 = scalar_lea.sflag [#allocation8], %s285
          %s287 = sand.u32 %s131, 1
          %s288 = smul.addr %s287, 64
          %s289 = scalar_lea.vmem [#allocation9], %s288
          %s290 = ssub.s32 %s28, 1
          %p291 = scmp.gt.s32.totalorder %s290, 0
          %s292 = scalar_select %p291, %s290, 0
          %s294 = ssub.s32 1024, 1024
          %295 = vsyncadd %s286, %s294
          %s296 = smul.addr %s292, 64
          %s297 = scalar_lea.hbm %s3, %s296
          %s298 = sshll.u32 %s289, 4
          %s299 = int_to_ptr.vmem [resolvable:$true] %s298
          %304 = dma.hbm_to_vmem [thread:$0]  %s297, 1024, %s299, %s286, 64, 64, 4
        $region32: #{tpu_custom_call.1} parent=19 // pred_fallthru
          _
        // Predicated region
        $region33: #{tpu_custom_call.1} parent=19 // pred_check
          %p305 = pneg %p173
        $region34: #{tpu_custom_call.1} parent=19 // pred_check_branch
          %307 = sbr.rel (%p305) target = $region36
        $region35: #{tpu_custom_call.1} parent=19 // pred_region
          %s308 = ssub.s32 %s28, 1
          %p309 = scmp.gt.s32.totalorder %s308, 0
          %s310 = scalar_select %p309, %s308, 0
          %p311 = scmp.lt.s32.totalorder %s310, 0
          %s312 = scalar_select %p311, %s310, 0
          %s313 = scalar_lea.vmem %s4, %s312
          %s314 = ssub.s32 %s28, 1
          %p315 = scmp.gt.s32.totalorder %s314, 0
          %s316 = scalar_select %p315, %s314, 0
        $region36: #{tpu_custom_call.1} parent=19 // pred_fallthru
          _
      $region20: #{tpu_custom_call.1} parent=5 // pred_fallthru
        _
      %p317 = scmp.le.s32.totalorder 1, %s20
      %p318 = scmp.lt.s32.totalorder %s20, 3
      %p319 = pnand %p317, %p318
      %p320 = pneg %p319
      // Predicated region
      $region37: #{tpu_custom_call.1} parent=5 // pred_check
        _
      $region38: #{tpu_custom_call.1} parent=5 // pred_check_branch
        %322 = sbr.rel (%p319) target = $region40
      $region39: #{tpu_custom_call.1} parent=5 // pred_region
        %s323 = ssub.s32 %s20, 1
        %s324 = sand.u32 %s51, 1
        %s325 = scalar_lea.sflag [#allocation5], %s324
        %s326 = sand.u32 %s51, 1
        %s327 = smul.addr %s326, 8
        %s328 = scalar_lea.vmem [#allocation4], %s327
        // Predicated region
        $region41: #{tpu_custom_call.1} parent=39 // pred_check
          %p329 = pneg %p64
        $region42: #{tpu_custom_call.1} parent=39 // pred_check_branch
          %331 = sbr.rel (%p329) target = $region44
        $region43: #{tpu_custom_call.1} parent=39 // pred_region
          %332 = dma.done %s325, 128
        $region44: #{tpu_custom_call.1} parent=39 // pred_fallthru
          _
        %s333 = sand.u32 %s25, 1
        %s334 = scalar_lea.sflag [#allocation8], %s333
        %s335 = sand.u32 %s81, 1
        %s336 = smul.addr %s335, 64
        %s337 = scalar_lea.vmem [#allocation7], %s336
        // Predicated region
        $region45: #{tpu_custom_call.1} parent=39 // pred_check
          %p338 = pneg %p94
        $region46: #{tpu_custom_call.1} parent=39 // pred_check_branch
          %340 = sbr.rel (%p338) target = $region48
        $region47: #{tpu_custom_call.1} parent=39 // pred_region
          %341 = dma.done %s334, 1024
        $region48: #{tpu_custom_call.1} parent=39 // pred_fallthru
          _
        %s342 = sand.u32 %s25, 1
        %s343 = scalar_lea.sflag [#allocation8], %s342
        %s344 = sand.u32 %s134, 1
        %s345 = smul.addr %s344, 64
        %s346 = scalar_lea.vmem [#allocation9], %s345
        // Predicated region
        $region49: #{tpu_custom_call.1} parent=39 // pred_check
          %p347 = pneg %p147
        $region50: #{tpu_custom_call.1} parent=39 // pred_check_branch
          %349 = sbr.rel (%p347) target = $region52
        $region51: #{tpu_custom_call.1} parent=39 // pred_region
          %350 = dma.done %s343, 1024
        $region52: #{tpu_custom_call.1} parent=39 // pred_fallthru
          _
        %s351 = sand.u32 %s51, 1
        %s352 = scalar_lea.sflag [#allocation5], %s351
        %s353 = sand.u32 %s51, 1
        %s354 = smul.addr %s353, 8
        %s355 = scalar_lea.vmem [#allocation4], %s354
        %p356 = pneg %p64
        %p357 = pneg %p61
        %s358 = sand.u32 %s25, 1
        %s359 = scalar_lea.sflag [#allocation8], %s358
        %s360 = sand.u32 %s81, 1
        %s361 = smul.addr %s360, 64
        %s362 = scalar_lea.vmem [#allocation7], %s361
        %p363 = pneg %p94
        %p364 = pneg %p91
        %p365 = pneg %p115
        %p366 = pneg %p112
        %s367 = sand.u32 %s25, 1
        %s368 = scalar_lea.sflag [#allocation8], %s367
        %s369 = sand.u32 %s134, 1
        %s370 = smul.addr %s369, 64
        %s371 = scalar_lea.vmem [#allocation9], %s370
        %p372 = pneg %p147
        %p373 = pneg %p144
        %s374 = ssub.s32 %s30, 1
        %p375 = scmp.gt.s32.totalorder %s374, 0
        %s376 = scalar_select %p375, %s374, 0
        %p377 = scmp.lt.s32.totalorder %s376, 0
        %s378 = scalar_select %p377, %s376, 0
        %s379 = scalar_lea.vmem %s4, %s378
        %p380 = pneg %p179
        %p381 = pneg %p176
        %p382 = pneg %p213
        %p383 = pneg %p210
        %s384 = sand.u32 %s200, 1
        %s385 = scalar_lea.sflag [#allocation6], %s384
        %s386 = sand.u32 %s200, 1
        %s387 = smul.addr %s386, 8
        %s388 = scalar_lea.vmem [#allocation10], %s387
        %p389 = scmp.lt.s32.totalorder %s30, 0
        %s390 = scalar_select %p389, %s30, 0
        %s391 = smul.u32 2, %s29
        %p392 = scmp.lt.s32.totalorder %s30, 0
        %s393 = scalar_select %p392, %s30, 0
        %s394 = smul.u32 16, %s393
        %s395 = ssub.s32 %s30, 1
        %p396 = scmp.gt.s32.totalorder %s395, 0
        %s397 = scalar_select %p396, %s395, 0
        %s398 = ssub.s32 %s30, 1
        %p399 = scmp.gt.s32.totalorder %s398, 0
        %s400 = scalar_select %p399, %s398, 0
        %p401 = scmp.lt.s32.totalorder %s400, 0
        %s402 = scalar_select %p401, %s400, 0
        %s403 = scalar_lea.vmem %s4, %s402
        %s404 = ssub.s32 %s30, 1
        %p405 = scmp.gt.s32.totalorder %s404, 0
        %s406 = scalar_select %p405, %s404, 0
        %s407 = ssub.s32 %s30, 1
        %p408 = scmp.gt.s32.totalorder %s407, 0
        %s409 = scalar_select %p408, %s407, 0
        %s410 = smul.u32 2, %s29
        %p412 = scmp.lt.s32.totalorder %s30, 1
        // Predicated region
        $region53: #{tpu_custom_call.1} parent=39 // pred_check
          %p413 = pneg %p412
        $region54: #{tpu_custom_call.1} parent=39 // pred_check_branch
          %415 = sbr.rel (%p413) target = $region56
        $region55: #{tpu_custom_call.1} parent=39 // pred_region
          %v416 = vld [vmem:[%s328] sm:$0xf]
          %v417 = vld [vmem:[%s328 + $0x4] sm:$0xf]
          %v418 = vld [vmem:[%s337] sm:$0xf]
          %v419 = vld [vmem:[%s337 + $0x4] sm:$0xf]
          %v420 = vld [vmem:[%s337 + $0x8] sm:$0xf]
          %v421 = vld [vmem:[%s337 + $0xc] sm:$0xf]
          %v422 = vld [vmem:[%s337 + $0x10] sm:$0xf]
          %v423 = vld [vmem:[%s337 + $0x14] sm:$0xf]
          %v424 = vld [vmem:[%s337 + $0x18] sm:$0xf]
          %v425 = vld [vmem:[%s337 + $0x1c] sm:$0xf]
          %v426 = vld [vmem:[%s337 + $0x20] sm:$0xf]
          %v427 = vld [vmem:[%s337 + $0x24] sm:$0xf]
          %v428 = vld [vmem:[%s337 + $0x28] sm:$0xf]
          %v429 = vld [vmem:[%s337 + $0x2c] sm:$0xf]
          %v430 = vld [vmem:[%s337 + $0x30] sm:$0xf]
          %v431 = vld [vmem:[%s337 + $0x34] sm:$0xf]
          %v432 = vld [vmem:[%s337 + $0x38] sm:$0xf]
          %v433 = vld [vmem:[%s337 + $0x3c] sm:$0xf]
          %v436 = vunpack.c.l.b16 %v416
          %v437 = vunpack.c.l.b16 %v417
          %v438 = vpack.c.b16 %v437, %v436
          %v456 = vunpack.c.l.b16 %v418
          %v457 = vunpack.c.l.b16 %v419
          %v458 = vunpack.c.l.b16 %v420
          %v459 = vunpack.c.l.b16 %v421
          %v460 = vunpack.c.l.b16 %v422
          %v461 = vunpack.c.l.b16 %v423
          %v462 = vunpack.c.l.b16 %v424
          %v463 = vunpack.c.l.b16 %v425
          %v464 = vunpack.c.l.b16 %v426
          %v465 = vunpack.c.l.b16 %v427
          %v466 = vunpack.c.l.b16 %v428
          %v467 = vunpack.c.l.b16 %v429
          %v468 = vunpack.c.l.b16 %v430
          %v469 = vunpack.c.l.b16 %v431
          %v470 = vunpack.c.l.b16 %v432
          %v471 = vunpack.c.l.b16 %v433
          %v472 = vpack.c.b16 %v457, %v456
          %v473 = vpack.c.b16 %v459, %v458
          %v474 = vpack.c.b16 %v461, %v460
          %v475 = vpack.c.b16 %v463, %v462
          %v476 = vpack.c.b16 %v465, %v464
          %v477 = vpack.c.b16 %v467, %v466
          %v478 = vpack.c.b16 %v469, %v468
          %v479 = vpack.c.b16 %v471, %v470
          %488 = vmatprep.subr.bf16.mxu0 0
          %489 = vmatpush1.bf16.msra.mxu0 %v472
          %490 = vmatprep.subr.bf16.mxu0 0
          %491 = vmatpush1.bf16.msra.mxu0 %v473
          %492 = vmatprep.subr.bf16.mxu0 0
          %493 = vmatpush1.bf16.msra.mxu0 %v474
          %494 = vmatprep.subr.bf16.mxu0 0
          %495 = vmatpush1.bf16.msra.mxu0 %v475
          %496 = vmatprep.subr.bf16.mxu0 0
          %497 = vmatpush1.bf16.msra.mxu0 %v476
          %498 = vmatprep.subr.bf16.mxu0 0
          %499 = vmatpush1.bf16.msra.mxu0 %v477
          %500 = vmatprep.subr.bf16.mxu0 0
          %501 = vmatpush1.bf16.msra.mxu0 %v478
          %502 = vmatprep.subr.bf16.mxu0 0
          %503 = vmatpush1.bf16.msra.mxu0 %v479
          %504 = vmatprep.subr.bf16.mxu0 0
          %505 = vmatpush1.bf16.msra.mxu0 0
          %506 = vmatprep.subr.bf16.mxu0 0
          %507 = vmatpush1.bf16.msra.mxu0 0
          %508 = vmatprep.subr.bf16.mxu0 0
          %509 = vmatpush1.bf16.msra.mxu0 0
          %510 = vmatprep.subr.bf16.mxu0 0
          %511 = vmatpush1.bf16.msra.mxu0 0
          %512 = vmatprep.subr.bf16.mxu0 0
          %513 = vmatpush1.bf16.msra.mxu0 0
          %514 = vmatprep.subr.bf16.mxu0 0
          %515 = vmatpush1.bf16.msra.mxu0 0
          %516 = vmatprep.subr.bf16.mxu0 0
          %517 = vmatpush1.bf16.msra.mxu0 0
          %518 = vmatprep.subr.bf16.mxu0 0
          %519 = vmatpush1.bf16.msra.mxu0 0
          %520 = vmatprep.mubr.bf16.mxu0 0
          %521 = vmatmul.mubr.bf16.gmra.mrb[0].mxu0 %v438
          %v522 = vpop.f32.mrb[0].mxu0
          %v523 = vadd.f32 0.0, %v522
          %v524 = vpop.f32.mrb[0].mxu0
          %v525 = vpop.f32.mrb[0].mxu0
          %v526 = vadd.f32 0.0, %v525
          %v527 = vpop.f32.mrb[0].mxu0
          %528 = vdwg.mxu0
          %p529 = scmp.eq.s32.totalorder %s30, 0
          // Predicated region
          $region57: #{tpu_custom_call.1} parent=55 // pred_check
            %p530 = pneg %p529
          $region58: #{tpu_custom_call.1} parent=55 // pred_check_branch
            %532 = sbr.rel (%p530) target = $region60
          $region59: #{tpu_custom_call.1} parent=55 // pred_region
            %v533 = vld [vmem:[%s2] sm:$0x1]
            %v535 = vlaneseq
            %v536 = vshrl.u32 %v535, 7
            %v537 = vsub.s32 0, %v536
            %v538 = vrot.slane %v533, %v537
            %v540 = vadd.f32 %v523, %v538
            %v541 = vadd.f32 %v526, %v538
            %542 = vst [vmem:[#allocation2] sm:$0xff] %v540
            %543 = vst [vmem:[#allocation2 + $0x8] sm:$0xff] %v541
          $region60: #{tpu_custom_call.1} parent=55 // pred_fallthru
            _
          %p544 = scmp.gt.s32.totalorder %s30, 0
          // Predicated region
          $region61: #{tpu_custom_call.1} parent=55 // pred_check
            %p545 = pneg %p544
          $region62: #{tpu_custom_call.1} parent=55 // pred_check_branch
            %547 = sbr.rel (%p545) target = $region64
          $region63: #{tpu_custom_call.1} parent=55 // pred_region
            %v548 = vld [vmem:[#allocation2] sm:$0xff]
            %v549 = vld [vmem:[#allocation2 + $0x8] sm:$0xff]
            %v550 = vadd.f32 %v548, %v523
            %v551 = vadd.f32 %v549, %v526
            %552 = vst [vmem:[#allocation2] sm:$0xff] %v550
            %553 = vst [vmem:[#allocation2 + $0x8] sm:$0xff] %v551
          $region64: #{tpu_custom_call.1} parent=55 // pred_fallthru
            _
        $region56: #{tpu_custom_call.1} parent=39 // pred_fallthru
          _
        %p554 = scmp.ge.s32.totalorder %s30, 1
        // Predicated region
        $region65: #{tpu_custom_call.1} parent=39 // pred_check
          %p555 = pneg %p554
        $region66: #{tpu_custom_call.1} parent=39 // pred_check_branch
          %557 = sbr.rel (%p555) target = $region68
        $region67: #{tpu_custom_call.1} parent=39 // pred_region
          %p558 = scmp.eq.s32.totalorder %s30, 1
          // Predicated region
          $region69: #{tpu_custom_call.1} parent=67 // pred_check
            %p559 = pneg %p558
          $region70: #{tpu_custom_call.1} parent=67 // pred_check_branch
            %561 = sbr.rel (%p559) target = $region72
          $region71: #{tpu_custom_call.1} parent=67 // pred_region
            %v562 = vld [vmem:[#allocation2] sm:$0xff]
            %v563 = vld [vmem:[#allocation2 + $0x8] sm:$0xff]
            %v564 = vmax.f32 %v562, 0.0
            %v565 = vmax.f32 %v563, 0.0
            %v566 = vpack.c.bf16 %v565, %v564
            %567 = vst [vmem:[#allocation3] sm:$0xff] %v566
          $region72: #{tpu_custom_call.1} parent=67 // pred_fallthru
            _
          %v568 = vld [vmem:[#allocation3] sm:$0xff]
          %v569 = vld [vmem:[%s346] sm:$0xf]
          %v570 = vld [vmem:[%s346 + $0x4] sm:$0xf]
          %v571 = vld [vmem:[%s346 + $0x8] sm:$0xf]
          %v572 = vld [vmem:[%s346 + $0xc] sm:$0xf]
          %v573 = vld [vmem:[%s346 + $0x10] sm:$0xf]
          %v574 = vld [vmem:[%s346 + $0x14] sm:$0xf]
          %v575 = vld [vmem:[%s346 + $0x18] sm:$0xf]
          %v576 = vld [vmem:[%s346 + $0x1c] sm:$0xf]
          %v577 = vld [vmem:[%s346 + $0x20] sm:$0xf]
          %v578 = vld [vmem:[%s346 + $0x24] sm:$0xf]
          %v579 = vld [vmem:[%s346 + $0x28] sm:$0xf]
          %v580 = vld [vmem:[%s346 + $0x2c] sm:$0xf]
          %v581 = vld [vmem:[%s346 + $0x30] sm:$0xf]
          %v582 = vld [vmem:[%s346 + $0x34] sm:$0xf]
          %v583 = vld [vmem:[%s346 + $0x38] sm:$0xf]
          %v584 = vld [vmem:[%s346 + $0x3c] sm:$0xf]
          %v585 = vld [vmem:[%s403] sm:$0x1]
          %v587 = vlaneseq
          %v588 = vshrl.u32 %v587, 7
          %v589 = vsub.s32 0, %v588
          %v590 = vrot.slane %v585, %v589
          %v608 = vunpack.c.l.b16 %v569
          %v609 = vunpack.c.l.b16 %v570
          %v610 = vunpack.c.l.b16 %v571
          %v611 = vunpack.c.l.b16 %v572
          %v612 = vunpack.c.l.b16 %v573
          %v613 = vunpack.c.l.b16 %v574
          %v614 = vunpack.c.l.b16 %v575
          %v615 = vunpack.c.l.b16 %v576
          %v616 = vunpack.c.l.b16 %v577
          %v617 = vunpack.c.l.b16 %v578
          %v618 = vunpack.c.l.b16 %v579
          %v619 = vunpack.c.l.b16 %v580
          %v620 = vunpack.c.l.b16 %v581
          %v621 = vunpack.c.l.b16 %v582
          %v622 = vunpack.c.l.b16 %v583
          %v623 = vunpack.c.l.b16 %v584
          %v624 = vpack.c.b16 %v609, %v608
          %v625 = vpack.c.b16 %v611, %v610
          %v626 = vpack.c.b16 %v613, %v612
          %v627 = vpack.c.b16 %v615, %v614
          %v628 = vpack.c.b16 %v617, %v616
          %v629 = vpack.c.b16 %v619, %v618
          %v630 = vpack.c.b16 %v621, %v620
          %v631 = vpack.c.b16 %v623, %v622
          %640 = vmatprep.subr.bf16.mxu0 0
          %641 = vmatpush1.bf16.msra.mxu0 %v624
          %642 = vmatprep.subr.bf16.mxu0 0
          %643 = vmatpush1.bf16.msra.mxu0 %v625
          %644 = vmatprep.subr.bf16.mxu0 0
          %645 = vmatpush1.bf16.msra.mxu0 %v626
          %646 = vmatprep.subr.bf16.mxu0 0
          %647 = vmatpush1.bf16.msra.mxu0 %v627
          %648 = vmatprep.subr.bf16.mxu0 0
          %649 = vmatpush1.bf16.msra.mxu0 %v628
          %650 = vmatprep.subr.bf16.mxu0 0
          %651 = vmatpush1.bf16.msra.mxu0 %v629
          %652 = vmatprep.subr.bf16.mxu0 0
          %653 = vmatpush1.bf16.msra.mxu0 %v630
          %654 = vmatprep.subr.bf16.mxu0 0
          %655 = vmatpush1.bf16.msra.mxu0 %v631
          %656 = vmatprep.subr.bf16.mxu0 0
          %657 = vmatpush1.bf16.msra.mxu0 0
          %658 = vmatprep.subr.bf16.mxu0 0
          %659 = vmatpush1.bf16.msra.mxu0 0
          %660 = vmatprep.subr.bf16.mxu0 0
          %661 = vmatpush1.bf16.msra.mxu0 0
          %662 = vmatprep.subr.bf16.mxu0 0
          %663 = vmatpush1.bf16.msra.mxu0 0
          %664 = vmatprep.subr.bf16.mxu0 0
          %665 = vmatpush1.bf16.msra.mxu0 0
          %666 = vmatprep.subr.bf16.mxu0 0
          %667 = vmatpush1.bf16.msra.mxu0 0
          %668 = vmatprep.subr.bf16.mxu0 0
          %669 = vmatpush1.bf16.msra.mxu0 0
          %670 = vmatprep.subr.bf16.mxu0 0
          %671 = vmatpush1.bf16.msra.mxu0 0
          %672 = vmatprep.mubr.bf16.mxu0 0
          %673 = vmatmul.mubr.bf16.gmra.mrb[0].mxu0 %v568
          %v674 = vpop.f32.mrb[0].mxu0
          %v675 = vadd.f32 %v590, %v674
          %v676 = vpop.f32.mrb[0].mxu0
          %v677 = vpop.f32.mrb[0].mxu0
          %v678 = vadd.f32 %v590, %v677
          %v679 = vpop.f32.mrb[0].mxu0
          %680 = vdwg.mxu0
          %v681 = vpack.c.bf16 %v678, %v675
          %v683 = vunpack.c.l.b16 %v681
          %v684 = vunpack.c.h.b16 %v681
          %v685 = vpack.c.b16 %v683, %v683
          %v686 = vpack.c.b16 %v684, %v684
          %689 = vst [vmem:[%s388] sm:$0xf] %v685
          %690 = vst [vmem:[%s388 + $0x4] sm:$0xf] %v686
        $region68: #{tpu_custom_call.1} parent=39 // pred_fallthru
          _
        %s691 = sand.u32 %s200, 1
        %s692 = scalar_lea.sflag [#allocation6], %s691
        %s693 = sand.u32 %s200, 1
        %s694 = smul.addr %s693, 8
        %s695 = scalar_lea.vmem [#allocation10], %s694
        // Predicated region
        $region73: #{tpu_custom_call.1} parent=39 // pred_check
          %p696 = pneg %p210
        $region74: #{tpu_custom_call.1} parent=39 // pred_check_branch
          %698 = sbr.rel (%p696) target = $region76
        $region75: #{tpu_custom_call.1} parent=39 // pred_region
          %s699 = ssub.s32 %s30, 1
          %p700 = scmp.gt.s32.totalorder %s699, 0
          %s701 = scalar_select %p700, %s699, 0
          %s702 = smul.u32 2, %s29
          %s704 = ssub.s32 128, 128
          %705 = vsyncadd %s692, %s704
          %s706 = sadd.s32 %s701, %s702
          %s707 = smul.addr %s706, 64
          %s708 = scalar_lea.hbm %s5, %s707
          %s709 = sshll.u32 %s695, 4
          %s710 = int_to_ptr.vmem [resolvable:$true] %s709
          %715 = dma.vmem_to_hbm [thread:$0]  %s710, 128, %s708, %s692, 64, 64, 4
        $region76: #{tpu_custom_call.1} parent=39 // pred_fallthru
          _
      $region40: #{tpu_custom_call.1} parent=5 // pred_fallthru
        _
      %p716 = scmp.le.s32.totalorder 2, %s20
      // Predicated region
      $region77: #{tpu_custom_call.1} parent=5 // pred_check
        %p717 = pneg %p716
      $region78: #{tpu_custom_call.1} parent=5 // pred_check_branch
        %719 = sbr.rel (%p717) target = $region80
      $region79: #{tpu_custom_call.1} parent=5 // pred_region
        %s720 = ssub.s32 %s20, 2
        // Predicated region
        $region81: #{tpu_custom_call.1} parent=79 // pred_check
          %p721 = pneg %p216
        $region82: #{tpu_custom_call.1} parent=79 // pred_check_branch
          %723 = sbr.rel (%p721) target = $region84
        $region83: #{tpu_custom_call.1} parent=79 // pred_region
          %s724 = sand.u32 %s201, 1
          %s725 = scalar_lea.sflag [#allocation6], %s724
          %s726 = sand.u32 %s201, 1
          %s727 = smul.addr %s726, 8
          %s728 = scalar_lea.vmem [#allocation10], %s727
          %729 = dma.done %s725, 128
        $region84: #{tpu_custom_call.1} parent=79 // pred_fallthru
          _
      $region80: #{tpu_custom_call.1} parent=5 // pred_fallthru
        _
    $region6: #{tpu_custom_call.1} parent=1 // loop_footer
      %s24 = sadd.s32 1, %s20
    $region7: #{tpu_custom_call.1} parent=1 // loop_footer_branch
      %19 = sbr.rel target = $region3
    $region8: #{tpu_custom_call.1} parent=1 // loop_exit
      _
    %730 = vsyncpa [#allocation5], 1
    %s731 = scalar_lea.sflag [#allocation5], 1
    %732 = vsyncpa %s731, 1
    %733 = vsyncpa [#allocation8], 1
    %s734 = scalar_lea.sflag [#allocation8], 1
    %735 = vsyncpa %s734, 1
    %736 = vsyncpa [#allocation6], 1
    %s737 = scalar_lea.sflag [#allocation6], 1
    %738 = vsyncpa %s737, 1

</llo_original>
